<compile_context>
chip_gen: v5e
topology: v5e:2x2
jax: 0.10.0
libtpu: 0.0.40
codegen_flags: <defaults>
</compile_context>

<pallas_src>
import functools

import jax
import jax.numpy as jnp
from jax.experimental import pallas as pl
from jax.experimental.pallas import tpu as pltpu


def _round_up(x, m):
    return ((x + m - 1) // m) * m


def _softplus(x):
    # Numerically stable softplus: max(x,0) + log1p(exp(-|x|))
    return jnp.maximum(x, 0.0) + jnp.log1p(jnp.exp(-jnp.abs(x)))


def _sigmoid(x):
    # Stable sigmoid via tanh (tanh lowers cleanly to the EUP).
    return 0.5 * (jnp.tanh(0.5 * x) + 1.0)


def actor_normal_kernel(x_ref, w1_ref, b1_ref, wh_ref, bh_ref, mu_ref, sg_ref):
    """One batch tile.

    x_ref  [TB, S]   (f32 or bf16)
    w1_ref [S, H],       b1_ref [1, H]          (VMEM-resident across the grid)
    wh_ref [H, 2*HALF],  bh_ref [1, 2*HALF]     (fused, lane-padded mu|sigma heads)
    mu_ref [TB, HALF] = sigmoid(head0)   (real action lanes are [:A])
    sg_ref [TB, HALF] = softplus(head1)
    """
    x = x_ref[...]
    # Hidden layer: tanh(x @ W1 + b1)  -- f32 accumulation on the MXU.
    h = jnp.dot(x, w1_ref[...], preferred_element_type=jnp.float32) + b1_ref[...]
    a = jnp.tanh(h).astype(wh_ref.dtype)                                  # [TB, H]
    # Fused heads: one MXU push for [mu | sigma] (lane-padded to 2*HALF).
    z = jnp.dot(a, wh_ref[...], preferred_element_type=jnp.float32) + bh_ref[...]
    half = mu_ref.shape[-1]
    # HALF is a multiple of 128 -> vreg-aligned split; each head gets exactly one
    # activation (no where-select EUP double work) and a dense, unmasked store.
    mu_ref[...] = _sigmoid(z[:, :half])
    sg_ref[...] = _softplus(z[:, half:])


def pack_actor_params(params):
    """One-time packing (hoisted out of the per-call forward).

    Fuses the mu / sigma heads into a single lane-padded [H, 2*HALF] weight and
    [1, 2*HALF] bias (HALF = round_up(action_dim, 128)); padded columns are zero
    so they produce harmless finite values that are sliced off in the wrapper.
    """
    w_mu, b_mu = params["w_mu"], params["b_mu"]        # [H, A], [1, A]
    w_sg, b_sg = params["w_sigma"], params["b_sigma"]  # [H, A], [1, A]
    H, A = w_mu.shape
    half = _round_up(max(A, 1), 128)
    w_heads = jnp.zeros((H, 2 * half), jnp.float32)
    w_heads = w_heads.at[:, :A].set(w_mu).at[:, half:half + A].set(w_sg)
    b_heads = jnp.zeros((1, 2 * half), jnp.float32)
    b_heads = b_heads.at[:, :A].set(b_mu).at[:, half:half + A].set(b_sg)
    return {"w1": params["w1"], "b1": params["b1"],
            "w_heads": w_heads, "b_heads": b_heads}


def _num_tensorcores():
    # v7x has 2 TensorCores per chip; v5e/v6e have 1. Fall back to 1 if unknown.
    try:
        return max(1, int(getattr(jax.devices()[0], "num_cores", 1) or 1))
    except Exception:
        return 1


@functools.partial(jax.jit,
                   static_argnames=("action_dim", "block_b", "grid_steps", "use_bf16"))
def actor_normal_forward(state, packed, *, action_dim, block_b=2048,
                         grid_steps=None, use_bf16=False):
    """state: [B, state_dim] float32. Returns (mu, sigma), each [B, action_dim]."""
    w1, b1 = packed["w1"], packed["b1"]                       # [S,H], [1,H]
    w_heads, b_heads = packed["w_heads"], packed["b_heads"]   # [H,2*HALF], [1,2*HALF]

    B, S = state.shape
    H = w1.shape[1]
    half = w_heads.shape[1] // 2
    A = action_dim

    if use_bf16:
        # Halve streamed HBM bytes / vreg footprint for the MXU operands;
        # accumulation stays f32 (preferred_element_type in the kernel).
        state = state.astype(jnp.bfloat16)
        w1 = w1.astype(jnp.bfloat16)
        w_heads = w_heads.astype(jnp.bfloat16)

    # --- batch tiling --------------------------------------------------------
    # This workload is per-grid-step-overhead bound, so use as few, as fat, tiles
    # as possible: 1 step on single-TC chips, 2 on v7x so both TCs are busy.
    steps = grid_steps if grid_steps is not None else _num_tensorcores()
    steps = max(1, int(steps))
    row = 16 if use_bf16 else 8                       # sublane alignment (bf16 packs 2x)
    b_aln = _round_up(B, row)
    tb = _round_up(pl.cdiv(b_aln, steps), row)        # tile targeting `steps` grid steps
    tb = max(row, min(tb, _round_up(block_b, row)))   # VMEM cap; always sublane-aligned
    bp = _round_up(b_aln, tb)
    if bp != B:
        state = jnp.pad(state, ((0, bp - B), (0, 0)))
    grid = (bp // tb,)

    const2d = lambda arr: pl.BlockSpec(arr.shape, lambda i: (0, 0))  # VMEM-resident

    # Advisory cost for the XLA scheduler (this call is tiny).
    flops = 2 * bp * S * H + 2 * bp * H * (2 * half)
    transcendentals = bp * H + 3 * bp * half          # tanh + sigmoid + softplus(exp,log1p)
    bytes_accessed = (state.size * state.dtype.itemsize
                      + w1.size * w1.dtype.itemsize + b1.size * b1.dtype.itemsize
                      + w_heads.size * w_heads.dtype.itemsize
                      + b_heads.size * b_heads.dtype.itemsize
                      + 2 * bp * half * 4)

    mu_p, sg_p = pl.pallas_call(
        actor_normal_kernel,
        out_shape=(jax.ShapeDtypeStruct((bp, half), jnp.float32),
                   jax.ShapeDtypeStruct((bp, half), jnp.float32)),
        grid=grid,
        in_specs=[
            pl.BlockSpec((tb, S), lambda i: (i, 0)),   # state streams by batch tile
            const2d(w1), const2d(b1),                  # tiny weights stay put in VMEM
            const2d(w_heads), const2d(b_heads),
        ],
        out_specs=(pl.BlockSpec((tb, half), lambda i: (i, 0)),   # dense 128-lane slabs
                   pl.BlockSpec((tb, half), lambda i: (i, 0))),
        compiler_params=pltpu.CompilerParams(
            dimension_semantics=("parallel",),         # batch split across TCs on v7x
        ),
        cost_estimate=pl.CostEstimate(flops=flops,
                                      transcendentals=transcendentals,
                                      bytes_accessed=bytes_accessed),
    )(state, w1, b1, w_heads, b_heads)

    mu = mu_p[:B, :A]
    sigma = sg_p[:B, :A]
    return mu, sigma


def init_params(key, state_dim, action_dim, nn_width):
    """Deterministic synthetic init (mimics nn.Linear's uniform fan-in init)."""
    ks = jax.random.split(key, 6)

    def linear(kw, kb, fan_in, fan_out):
        bound = 1.0 / jnp.sqrt(fan_in)
        w = jax.random.uniform(kw, (fan_in, fan_out), jnp.float32, -bound, bound)
        b = jax.random.uniform(kb, (1, fan_out), jnp.float32, -bound, bound)
        return w, b

    w1, b1 = linear(ks[0], ks[1], state_dim, nn_width)
    w_mu, b_mu = linear(ks[2], ks[3], nn_width, action_dim)
    w_sg, b_sg = linear(ks[4], ks[5], nn_width, action_dim)
    return {"w1": w1, "b1": b1,
            "w_mu": w_mu, "b_mu": b_mu,
            "w_sigma": w_sg, "b_sigma": b_sg}


if __name__ == "__main__":
    batch, state_dim, action_dim, nn_width = 8, 16, 4, 32

    key = jax.random.PRNGKey(0)
    k_params, k_state = jax.random.split(key)
    raw = init_params(k_params, state_dim, action_dim, nn_width)
    packed = pack_actor_params(raw)          # one-time head fusion + lane padding
    state = jax.random.normal(k_state, (batch, state_dim), jnp.float32)

    mu, sigma = actor_normal_forward(state, packed, action_dim=action_dim)
    jax.block_until_ready((mu, sigma))

    # Pure-JAX reference check (matches PyTorch Actor_Normal.forward)
    a_ref = jnp.tanh(state @ raw["w1"] + raw["b1"])
    mu_ref = jax.nn.sigmoid(a_ref @ raw["w_mu"] + raw["b_mu"])
    sg_ref = jax.nn.softplus(a_ref @ raw["w_sigma"] + raw["b_sigma"])
    assert mu.shape == (batch, action_dim) and sigma.shape == (batch, action_dim)
    assert jnp.allclose(mu, mu_ref, atol=1e-5, rtol=1e-5)
    assert jnp.allclose(sigma, sg_ref, atol=1e-5, rtol=1e-5)
    assert bool(jnp.all(mu > 0.0)) and bool(jnp.all(mu < 1.0))
    assert bool(jnp.all(sigma > 0.0))

    # Larger batch, not a multiple of the tile (exercises padding + the
    # single/two-step fat-tile grid path).
    big = jax.random.normal(jax.random.PRNGKey(1), (1000, state_dim), jnp.float32)
    mu_b, sg_b = actor_normal_forward(big, packed, action_dim=action_dim)
    jax.block_until_ready((mu_b, sg_b))
    a_b = jnp.tanh(big @ raw["w1"] + raw["b1"])
    mu_b_ref = jax.nn.sigmoid(a_b @ raw["w_mu"] + raw["b_mu"])
    sg_b_ref = jax.nn.softplus(a_b @ raw["w_sigma"] + raw["b_sigma"])
    assert jnp.allclose(mu_b, mu_b_ref, atol=1e-5, rtol=1e-5)
    assert jnp.allclose(sg_b, sg_b_ref, atol=1e-5, rtol=1e-5)

    # Optional bf16 streaming of the MXU operands (f32 accumulation); looser
    # tolerance since inputs/weights are rounded to bf16.
    mu16, sg16 = actor_normal_forward(big, packed, action_dim=action_dim, use_bf16=True)
    jax.block_until_ready((mu16, sg16))
    assert jnp.allclose(mu16, mu_b_ref, atol=5e-2, rtol=5e-2)
    assert jnp.allclose(sg16, sg_b_ref, atol=5e-2, rtol=5e-2)

    print("KERNEL_OK")
</pallas_src>

<mosaic_0001>
module attributes {stable_mosaic.version = 11 : i64} {
  func.func @actor_normal_kernel(%arg0: i32, %arg1: memref<8x16xf32, #tpu.memory_space<vmem>>, %arg2: memref<16x32xf32, #tpu.memory_space<vmem>>, %arg3: memref<1x32xf32, #tpu.memory_space<vmem>>, %arg4: memref<32x256xf32, #tpu.memory_space<vmem>>, %arg5: memref<1x256xf32, #tpu.memory_space<vmem>>, %arg6: memref<8x128xf32, #tpu.memory_space<vmem>>, %arg7: memref<8x128xf32, #tpu.memory_space<vmem>>) attributes {dimension_semantics = [#tpu.dimension_semantics<parallel>], iteration_bounds = array<i64: 1>, scalar_prefetch = 0 : i64, scratch_operands = 0 : i64, tpu.core_type = #tpu.core_type<tc>, window_params = [{transform_indices = @transform_0, window_bounds = array<i64: 8, 16>}, {pipeline_mode = #tpu.pipeline_mode<synchronous>, transform_indices = @transform_1, window_bounds = array<i64: 16, 32>}, {pipeline_mode = #tpu.pipeline_mode<synchronous>, transform_indices = @transform_2, window_bounds = array<i64: 1, 32>}, {pipeline_mode = #tpu.pipeline_mode<synchronous>, transform_indices = @transform_3, window_bounds = array<i64: 32, 256>}, {pipeline_mode = #tpu.pipeline_mode<synchronous>, transform_indices = @transform_4, window_bounds = array<i64: 1, 256>}, {transform_indices = @transform_5, window_bounds = array<i64: 8, 128>}, {transform_indices = @transform_6, window_bounds = array<i64: 8, 128>}]} {
    %c0 = arith.constant 0 : index
    %c0_0 = arith.constant 0 : index
    %0 = vector.load %arg1[%c0, %c0_0] : memref<8x16xf32, #tpu.memory_space<vmem>>, vector<8x16xf32>
    %c0_1 = arith.constant 0 : index
    %c0_2 = arith.constant 0 : index
    %1 = vector.load %arg2[%c0_1, %c0_2] : memref<16x32xf32, #tpu.memory_space<vmem>>, vector<16x32xf32>
    %cst = arith.constant dense<0.000000e+00> : vector<8x32xf32>
    %2 = tpu.matmul %0, %1, %cst {dimension_numbers = #tpu.dot_dimension_numbers<[1], [0], [0], [1], [0, 0, 1, 1], [], []>} : vector<8x16xf32>, vector<16x32xf32>, vector<8x32xf32> -> vector<8x32xf32>
    %c0_3 = arith.constant 0 : index
    %c0_4 = arith.constant 0 : index
    %3 = vector.load %arg3[%c0_3, %c0_4] : memref<1x32xf32, #tpu.memory_space<vmem>>, vector<1x32xf32>
    %4 = vector.broadcast %3 : vector<1x32xf32> to vector<8x32xf32>
    %5 = arith.addf %2, %4 : vector<8x32xf32>
    %6 = math.tanh %5 : vector<8x32xf32>
    %c0_5 = arith.constant 0 : index
    %c0_6 = arith.constant 0 : index
    %7 = vector.load %arg4[%c0_5, %c0_6] : memref<32x256xf32, #tpu.memory_space<vmem>>, vector<32x256xf32>
    %cst_7 = arith.constant dense<0.000000e+00> : vector<8x256xf32>
    %8 = tpu.matmul %6, %7, %cst_7 {dimension_numbers = #tpu.dot_dimension_numbers<[1], [0], [0], [1], [0, 0, 1, 1], [], []>} : vector<8x32xf32>, vector<32x256xf32>, vector<8x256xf32> -> vector<8x256xf32>
    %c0_8 = arith.constant 0 : index
    %c0_9 = arith.constant 0 : index
    %9 = vector.load %arg5[%c0_8, %c0_9] : memref<1x256xf32, #tpu.memory_space<vmem>>, vector<1x256xf32>
    %10 = vector.broadcast %9 : vector<1x256xf32> to vector<8x256xf32>
    %11 = arith.addf %8, %10 : vector<8x256xf32>
    %12 = vector.extract_strided_slice %11 {offsets = [0, 0], sizes = [8, 128], strides = [1, 1]} : vector<8x256xf32> to vector<8x128xf32>
    %cst_10 = arith.constant 5.000000e-01 : f32
    %13 = vector.broadcast %cst_10 : f32 to vector<8x128xf32>
    %14 = arith.mulf %13, %12 : vector<8x128xf32>
    %15 = math.tanh %14 : vector<8x128xf32>
    %cst_11 = arith.constant 1.000000e+00 : f32
    %16 = vector.broadcast %cst_11 : f32 to vector<8x128xf32>
    %17 = arith.addf %15, %16 : vector<8x128xf32>
    %cst_12 = arith.constant 5.000000e-01 : f32
    %18 = vector.broadcast %cst_12 : f32 to vector<8x128xf32>
    %19 = arith.mulf %18, %17 : vector<8x128xf32>
    %c0_13 = arith.constant 0 : index
    %c0_14 = arith.constant 0 : index
    %20 = vector.load %arg6[%c0_13, %c0_14] : memref<8x128xf32, #tpu.memory_space<vmem>>, vector<8x128xf32>
    tpu.vector_store %arg6[%c0_13, %c0_14], %19 {strides = array<i32>} : memref<8x128xf32, #tpu.memory_space<vmem>>, vector<8x128xf32>,
    %21 = vector.extract_strided_slice %11 {offsets = [0, 128], sizes = [8, 128], strides = [1, 1]} : vector<8x256xf32> to vector<8x128xf32>
    %cst_15 = arith.constant 0.000000e+00 : f32
    %22 = vector.broadcast %cst_15 : f32 to vector<8x128xf32>
    %23 = arith.maximumf %21, %22 : vector<8x128xf32>
    %24 = math.absf %21 : vector<8x128xf32>
    %cst_16 = arith.constant 0.000000e+00 : f32
    %25 = vector.broadcast %cst_16 : f32 to vector<8x128xf32>
    %26 = arith.subf %25, %24 : vector<8x128xf32>
    %27 = math.exp %26 : vector<8x128xf32>
    %28 = math.log1p %27 : vector<8x128xf32>
    %29 = arith.addf %23, %28 : vector<8x128xf32>
    %c0_17 = arith.constant 0 : index
    %c0_18 = arith.constant 0 : index
    %30 = vector.load %arg7[%c0_17, %c0_18] : memref<8x128xf32, #tpu.memory_space<vmem>>, vector<8x128xf32>
    tpu.vector_store %arg7[%c0_17, %c0_18], %29 {strides = array<i32>} : memref<8x128xf32, #tpu.memory_space<vmem>>, vector<8x128xf32>,
    return
  }
  func.func @transform_0(%arg0: i32) -> (i32, i32) {
    %c0_i32 = arith.constant 0 : i32
    %c0_i32_0 = arith.constant 0 : i32
    return %arg0, %c0_i32 : i32, i32
  }
  func.func @transform_1(%arg0: i32) -> (i32, i32) {
    %c0_i32 = arith.constant 0 : i32
    %c0_i32_0 = arith.constant 0 : i32
    %c0_i32_1 = arith.constant 0 : i32
    return %c0_i32, %c0_i32_0 : i32, i32
  }
  func.func @transform_2(%arg0: i32) -> (i32, i32) {
    %c0_i32 = arith.constant 0 : i32
    %c0_i32_0 = arith.constant 0 : i32
    %c0_i32_1 = arith.constant 0 : i32
    return %c0_i32, %c0_i32_0 : i32, i32
  }
  func.func @transform_3(%arg0: i32) -> (i32, i32) {
    %c0_i32 = arith.constant 0 : i32
    %c0_i32_0 = arith.constant 0 : i32
    %c0_i32_1 = arith.constant 0 : i32
    return %c0_i32, %c0_i32_0 : i32, i32
  }
  func.func @transform_4(%arg0: i32) -> (i32, i32) {
    %c0_i32 = arith.constant 0 : i32
    %c0_i32_0 = arith.constant 0 : i32
    %c0_i32_1 = arith.constant 0 : i32
    return %c0_i32, %c0_i32_0 : i32, i32
  }
  func.func @transform_5(%arg0: i32) -> (i32, i32) {
    %c0_i32 = arith.constant 0 : i32
    %c0_i32_0 = arith.constant 0 : i32
    return %arg0, %c0_i32 : i32, i32
  }
  func.func @transform_6(%arg0: i32) -> (i32, i32) {
    %c0_i32 = arith.constant 0 : i32
    %c0_i32_0 = arith.constant 0 : i32
    return %arg0, %c0_i32 : i32, i32
  }
}

</mosaic_0001>

<llo_original>
// kernel: actor_normal_forward.1
$region0: #{actor_normal_forward.1}
  #allocation0 [shape = 'u32[]', space=smem, size = 0x4, offset = 0x4, fixed_abs, tag = 'smem constant byte address 0x4 - core index']
  #allocation1 [shape = 'u32[72,128]{1,0:T(1,128)}', space=vmem, size = 0x9000, scoped, tag = 'internal scratch']
  %s0 = inlined_call_operand.hbm [shape: f32[8,16], index: 0, kind: input, shape index: {}]
  %s1 = inlined_call_operand.hbm [shape: f32[16,32], index: 1, kind: input, shape index: {}]
  %s2 = inlined_call_operand.hbm [shape: f32[1,32], index: 2, kind: input, shape index: {}]
  %s3 = inlined_call_operand.hbm [shape: f32[32,256], index: 3, kind: input, shape index: {}]
  %s4 = inlined_call_operand.hbm [shape: f32[1,256], index: 4, kind: input, shape index: {}]
  %s5 = inlined_call_operand.vmem [shape: f32[8,128], index: 5, kind: output, shape index: {0}]
  %s6 = inlined_call_operand.vmem [shape: f32[8,128], index: 6, kind: output, shape index: {1}]
  %7 = xla_tuple %s5, %s6
  %s8 = sld [smem:[#allocation0]]
  $region58: #{actor_normal_forward.1} parent=0
    _
  %s10 = ssub.s32 1, %s8
  %s11 = scalar_select 0, %s10, %s8
  $region1: #{actor_normal_forward.1} parent=0
    #allocation2 [shape = 'u8[4096]{0}', space=vmem, size = 0x1000, scoped, tag = 'input window, operand 0, single buffered']
    #allocation3 [shape = 's32[1]{0}', space=sflag, size = 0x4, scoped, tag = 'scoped memory for actor_normal_forward.1']
    #allocation4 [shape = 'u8[8192]{0}', space=vmem, size = 0x2000, scoped, tag = 'input window, operand 1, single buffered']
    #allocation5 [shape = 's32[1]{0}', space=sflag, size = 0x4, scoped, tag = 'scoped memory for actor_normal_forward.1']
    #allocation6 [shape = 'u8[512]{0}', space=vmem, size = 0x400, scoped, tag = 'input window, operand 2, single buffered']
    #allocation7 [shape = 'u8[32768]{0}', space=vmem, size = 0x8000, scoped, tag = 'input window, operand 3, single buffered']
    #allocation8 [shape = 's32[1]{0}', space=sflag, size = 0x4, scoped, tag = 'scoped memory for actor_normal_forward.1']
    #allocation9 [shape = 'u8[1024]{0}', space=vmem, size = 0x400, scoped, tag = 'input window, operand 4, single buffered']
    %12 = vsyncpa [#allocation3], 0
    %13 = vsyncpa [#allocation5], 0
    %14 = vsyncpa [#allocation8], 0
    // Predicated region
    $region2: #{actor_normal_forward.1} parent=1 // pred_check
      _
    $region3: #{actor_normal_forward.1} parent=1 // pred_check_branch
      %16 = sbr.rel (0) target = $region5
    $region4: #{actor_normal_forward.1} parent=1 // pred_region
      %18 = vsyncadd [#allocation3], 0
      %s20 = sshll.u32 %s0, 4
      %s21 = int_to_ptr.hbm [resolvable:$true] %s20
      %s22 = sshll.u32 [#allocation2], 4
      %s23 = int_to_ptr.vmem [resolvable:$true] %s22
      %25 = dma.hbm_to_vmem [thread:$0]  %s21, 128, %s23, [#allocation3]
    $region5: #{actor_normal_forward.1} parent=1 // pred_fallthru
      _
    // Predicated region
    $region6: #{actor_normal_forward.1} parent=1 // pred_check
      _
    $region7: #{actor_normal_forward.1} parent=1 // pred_check_branch
      %27 = sbr.rel (0) target = $region9
    $region8: #{actor_normal_forward.1} parent=1 // pred_region
      %29 = vsyncadd [#allocation5], 0
      %s30 = sshll.u32 %s1, 4
      %s31 = int_to_ptr.hbm [resolvable:$true] %s30
      %s32 = sshll.u32 [#allocation4], 4
      %s33 = int_to_ptr.vmem [resolvable:$true] %s32
      %38 = dma.hbm_to_vmem [thread:$0]  %s31, 256, %s33, [#allocation5], 128, 128, 8
    $region9: #{actor_normal_forward.1} parent=1 // pred_fallthru
      _
    // Predicated region
    $region10: #{actor_normal_forward.1} parent=1 // pred_check
      _
    $region11: #{actor_normal_forward.1} parent=1 // pred_check_branch
      %40 = sbr.rel (0) target = $region13
    $region12: #{actor_normal_forward.1} parent=1 // pred_region
      %42 = vsyncadd [#allocation5], 0
      %s44 = sshll.u32 %s2, 4
      %s45 = int_to_ptr.hbm [resolvable:$true] %s44
      %s46 = sshll.u32 [#allocation6], 4
      %s47 = int_to_ptr.vmem [resolvable:$true] %s46
      %49 = dma.hbm_to_vmem [thread:$0]  %s45, 16, %s47, [#allocation5]
    $region13: #{actor_normal_forward.1} parent=1 // pred_fallthru
      _
    // Predicated region
    $region14: #{actor_normal_forward.1} parent=1 // pred_check
      _
    $region15: #{actor_normal_forward.1} parent=1 // pred_check_branch
      %51 = sbr.rel (0) target = $region17
    $region16: #{actor_normal_forward.1} parent=1 // pred_region
      %53 = vsyncadd [#allocation8], 0
      %s54 = sshll.u32 %s3, 4
      %s55 = int_to_ptr.hbm [resolvable:$true] %s54
      %s56 = sshll.u32 [#allocation7], 4
      %s57 = int_to_ptr.vmem [resolvable:$true] %s56
      %62 = dma.hbm_to_vmem [thread:$0]  %s55, 1024, %s57, [#allocation8], 256, 256, 16
    $region17: #{actor_normal_forward.1} parent=1 // pred_fallthru
      _
    // Predicated region
    $region18: #{actor_normal_forward.1} parent=1 // pred_check
      _
    $region19: #{actor_normal_forward.1} parent=1 // pred_check_branch
      %64 = sbr.rel (0) target = $region21
    $region20: #{actor_normal_forward.1} parent=1 // pred_region
      %66 = vsyncadd [#allocation8], 0
      %s68 = sshll.u32 %s4, 4
      %s69 = int_to_ptr.hbm [resolvable:$true] %s68
      %s70 = sshll.u32 [#allocation9], 4
      %s71 = int_to_ptr.vmem [resolvable:$true] %s70
      %73 = dma.hbm_to_vmem [thread:$0]  %s69, 32, %s71, [#allocation8]
    $region21: #{actor_normal_forward.1} parent=1 // pred_fallthru
      _
    // Predicated region
    $region22: #{actor_normal_forward.1} parent=1 // pred_check
      _
    $region23: #{actor_normal_forward.1} parent=1 // pred_check_branch
      %75 = sbr.rel (0) target = $region25
    $region24: #{actor_normal_forward.1} parent=1 // pred_region
      %77 = dma.done [#allocation3], 128
    $region25: #{actor_normal_forward.1} parent=1 // pred_fallthru
      _
    // Predicated region
    $region26: #{actor_normal_forward.1} parent=1 // pred_check
      _
    $region27: #{actor_normal_forward.1} parent=1 // pred_check_branch
      %79 = sbr.rel (0) target = $region29
    $region28: #{actor_normal_forward.1} parent=1 // pred_region
      %81 = dma.done [#allocation5], 256
    $region29: #{actor_normal_forward.1} parent=1 // pred_fallthru
      _
    // Predicated region
    $region30: #{actor_normal_forward.1} parent=1 // pred_check
      _
    $region31: #{actor_normal_forward.1} parent=1 // pred_check_branch
      %83 = sbr.rel (0) target = $region33
    $region32: #{actor_normal_forward.1} parent=1 // pred_region
      %85 = dma.done [#allocation5], 16
    $region33: #{actor_normal_forward.1} parent=1 // pred_fallthru
      _
    // Predicated region
    $region34: #{actor_normal_forward.1} parent=1 // pred_check
      _
    $region35: #{actor_normal_forward.1} parent=1 // pred_check_branch
      %87 = sbr.rel (0) target = $region37
    $region36: #{actor_normal_forward.1} parent=1 // pred_region
      %89 = dma.done [#allocation8], 1024
    $region37: #{actor_normal_forward.1} parent=1 // pred_fallthru
      _
    // Predicated region
    $region38: #{actor_normal_forward.1} parent=1 // pred_check
      _
    $region39: #{actor_normal_forward.1} parent=1 // pred_check_branch
      %91 = sbr.rel (0) target = $region41
    $region40: #{actor_normal_forward.1} parent=1 // pred_region
      %93 = dma.done [#allocation8], 32
    $region41: #{actor_normal_forward.1} parent=1 // pred_fallthru
      _
    %v94 = vld [vmem:[#allocation2] sm:$0xff]
    %v95 = vld [vmem:[#allocation4] sm:$0xff]
    %v96 = vld [vmem:[#allocation4 + $0x8] sm:$0xff]
    %v97 = vld [vmem:[#allocation6] sm:$0x1]
    %v99 = vperm.slane %v97, 0
    %vm101 = vcmask 130048
    %v103 = vsel %vm101, %v94, 0
    %105 = vmatpush.msra.mxu0 0.0
    %106 = vmatpush.msra.mxu0 0.0
    %107 = vmatpush.msra.mxu0 0.0
    %108 = vmatpush.msra.mxu0 0.0
    %109 = vmatpush.msra.mxu0 0.0
    %110 = vmatpush.msra.mxu0 0.0
    %111 = vmatpush.msra.mxu0 0.0
    %112 = vmatpush.msra.mxu0 0.0
    %113 = vmatpush.msra.mxu0 0.0
    %114 = vmatpush.msra.mxu0 0.0
    %115 = vmatpush.msra.mxu0 0.0
    %116 = vmatpush.msra.mxu0 0.0
    %117 = vmatpush.msra.mxu0 0.0
    %118 = vmatpush.msra.mxu0 0.0
    %119 = vmatpush.msra.mxu0 %v96
    %120 = vmatpush.msra.mxu0 %v95
    %121 = vmatmul.f32.gmra.mxu0 %v103
    %v122 = vpop.f32.mrf.mxu0
    %v123 = vadd.f32 %v99, %v122
    %124 = vdwg.mxu0
    %v125 = vtanh.pop %v123
    %v126 = vld [vmem:[#allocation7] sm:$0xff]
    %v127 = vld [vmem:[#allocation7 + $0x8] sm:$0xff]
    %v128 = vld [vmem:[#allocation7 + $0x10] sm:$0xff]
    %v129 = vld [vmem:[#allocation7 + $0x18] sm:$0xff]
    %v130 = vld [vmem:[#allocation7 + $0x20] sm:$0xff]
    %v131 = vld [vmem:[#allocation7 + $0x28] sm:$0xff]
    %v132 = vld [vmem:[#allocation7 + $0x30] sm:$0xff]
    %v133 = vld [vmem:[#allocation7 + $0x38] sm:$0xff]
    %v134 = vld [vmem:[#allocation9] sm:$0x3]
    %v136 = vperm.slane %v134, 0
    %v137 = vperm.slane %v134, 1
    %vm140 = vcmask 261120
    %v142 = vsel %vm140, %v125, 0
    %144 = vmatpush.msra.mxu0 0.0
    %145 = vmatpush.msra.mxu0 0.0
    %146 = vmatpush.msra.mxu0 0.0
    %147 = vmatpush.msra.mxu0 0.0
    %148 = vmatpush.msra.mxu0 0.0
    %149 = vmatpush.msra.mxu0 0.0
    %150 = vmatpush.msra.mxu0 0.0
    %151 = vmatpush.msra.mxu0 0.0
    %152 = vmatpush.msra.mxu0 0.0
    %153 = vmatpush.msra.mxu0 0.0
    %154 = vmatpush.msra.mxu0 0.0
    %155 = vmatpush.msra.mxu0 0.0
    %156 = vmatpush.msra.mxu0 %v132
    %157 = vmatpush.msra.mxu0 %v130
    %158 = vmatpush.msra.mxu0 %v128
    %159 = vmatpush.msra.mxu0 %v126
    %160 = vmatmul.f32.gmra.mxu0 %v142
    %v161 = vpop.f32.mrf.mxu0
    %v162 = vadd.f32 %v136, %v161
    %163 = vdwg.mxu0
    %164 = vmatpush.msra.mxu0 0.0
    %165 = vmatpush.msra.mxu0 0.0
    %166 = vmatpush.msra.mxu0 0.0
    %167 = vmatpush.msra.mxu0 0.0
    %168 = vmatpush.msra.mxu0 0.0
    %169 = vmatpush.msra.mxu0 0.0
    %170 = vmatpush.msra.mxu0 0.0
    %171 = vmatpush.msra.mxu0 0.0
    %172 = vmatpush.msra.mxu0 0.0
    %173 = vmatpush.msra.mxu0 0.0
    %174 = vmatpush.msra.mxu0 0.0
    %175 = vmatpush.msra.mxu0 0.0
    %176 = vmatpush.msra.mxu0 %v133
    %177 = vmatpush.msra.mxu0 %v131
    %178 = vmatpush.msra.mxu0 %v129
    %179 = vmatpush.msra.mxu0 %v127
    %180 = vmatmul.f32.gmra.mxu0 %v142
    %v181 = vpop.f32.mrf.mxu0
    %v182 = vadd.f32 %v137, %v181
    %183 = vdwg.mxu0
    %v184 = vmul.f32 %v162, 0.5
    %v185 = vtanh.pop %v184
    %v186 = vadd.f32 %v185, 1.0
    %v187 = vmul.f32 %v186, 0.5
    %188 = vst [vmem:[%s5] sm:$0xff] %v187
    %v189 = vmax.f32 %v182, 0.0
    %v190 = vand.u32 2147483647, %v182
    %v191 = vsub.f32 0.0, %v190
    %v192 = vmul.f32 %v191, 1.442695
    %v193 = vpow.pop %v192
    %v194 = vadd.f32 %v193, 1.0
    %v195 = vlog2.pop %v194
    %v196 = vmul.f32 %v195, 0.6931472
    %v197 = vmul.f32 -0.5, %v193
    %v198 = vadd.f32 %v197, 1.0
    %v199 = vmul.f32 %v198, %v193
    %v200 = vand.u32 2147483647, %v193
    %vm201 = vcmp.lt.f32.partialorder %v200, 0.0004427343
    %v202 = vsel %vm201, %v199, %v196
    %v203 = vadd.f32 %v189, %v202
    %204 = vst [vmem:[%s6] sm:$0xff] %v203
    // Predicated region
    $region42: #{actor_normal_forward.1} parent=1 // pred_check
      _
    $region43: #{actor_normal_forward.1} parent=1 // pred_check_branch
      %206 = sbr.rel (0) target = $region45
    $region44: #{actor_normal_forward.1} parent=1 // pred_region
      _
    $region45: #{actor_normal_forward.1} parent=1 // pred_fallthru
      _
    // Predicated region
    $region46: #{actor_normal_forward.1} parent=1 // pred_check
      _
    $region47: #{actor_normal_forward.1} parent=1 // pred_check_branch
      %208 = sbr.rel (0) target = $region49
    $region48: #{actor_normal_forward.1} parent=1 // pred_region
      _
    $region49: #{actor_normal_forward.1} parent=1 // pred_fallthru
      _
    // Predicated region
    $region50: #{actor_normal_forward.1} parent=1 // pred_check
      _
    $region51: #{actor_normal_forward.1} parent=1 // pred_check_branch
      %210 = sbr.rel (0) target = $region53
    $region52: #{actor_normal_forward.1} parent=1 // pred_region
      _
    $region53: #{actor_normal_forward.1} parent=1 // pred_fallthru
      _
    // Predicated region
    $region54: #{actor_normal_forward.1} parent=1 // pred_check
      _
    $region55: #{actor_normal_forward.1} parent=1 // pred_check_branch
      %212 = sbr.rel (0) target = $region57
    $region56: #{actor_normal_forward.1} parent=1 // pred_region
      _
    $region57: #{actor_normal_forward.1} parent=1 // pred_fallthru
      _
    %213 = vsyncpa [#allocation3], 1
    %214 = vsyncpa [#allocation5], 1
    %215 = vsyncpa [#allocation8], 1

</llo_original>
